<compile_context>
chip_gen: v6e
topology: v6e:2x2x1
jax: 0.10.0
libtpu: 0.0.40
codegen_flags: <defaults>
</compile_context>

<pallas_src>
import functools

import jax
import jax.numpy as jnp
import numpy as np
from jax.experimental import pallas as pl
from jax.experimental.pallas import tpu as pltpu

NUM_CLASSES = 13
HALF_FRAMES = 16
FRAME_BLK = 8                       # frames per core (16 output frames / 2)
THREE_AXES = 3 * NUM_CLASSES        # 39

MAX_T_BLK = 512
VMEM_LIMIT_BYTES = 32 * 1024 * 1024


def _pick_t_blk(t_total):
    if t_total <= MAX_T_BLK:
        return t_total              # full time dim -> always a legal block
    return MAX_T_BLK                # multiple of 8


def _mse_mix_kernel(pred_ref, tgt1_ref, tgt2_ref, acc_ref, *,
                    t_total, t_blk, needs_mask):
    """pred/tgt1/tgt2 blocks: (8, t_blk, 39); acc (output) block: (1, 8, 39)."""
    t = pl.program_id(1)

    @pl.when(t == 0)
    def _():
        acc_ref[...] = jnp.zeros_like(acc_ref)

    # Three full-width loads; everything below is computed from values.
    pred = pred_ref[...]            # (8, t_blk, 39)
    t1 = tgt1_ref[...]              # primary-event frames
    tm = tgt2_ref[...]              # mixed-in-event frames

    sq1 = t1 * t1
    sqm = tm * tm

    # Per-class sum of squares over the three (x, y, z) axis groups.
    def class_energy(sq):
        return (sq[:, :, 0:NUM_CLASSES]
                + sq[:, :, NUM_CLASSES:2 * NUM_CLASSES]
                + sq[:, :, 2 * NUM_CLASSES:3 * NUM_CLASSES])

    s13 = jnp.sqrt(class_energy(sq1)) + jnp.sqrt(class_energy(sqm))
    # Broadcast the per-class magnitude sum across the 3 axis groups (floats,
    # so the lane-axis concatenate stays a plain relayout).
    s39 = jnp.concatenate([s13, s13, s13], axis=-1)          # (8, t_blk, 39)

    # gate == 1 iff 0.5 <= s <= 1.5; expressed as a keep-mask + select so no
    # 0/1 float gate or extra multiply is materialized.
    keep = (s39 >= 0.5) & (s39 <= 1.5)
    diff = pred - (t1 + jnp.where(keep, tm, 0.0))
    sq = diff * diff                                          # (8, t_blk, 39)

    if needs_mask:
        last_t = pl.num_programs(1) - 1

        @pl.when(t == last_t)
        def _():
            # Zero padded tail rows via a select (NOT a multiply) so NaN/Inf
            # from out-of-range block data cannot leak into the sum.
            remaining = t_total - t * t_blk
            tidx = jax.lax.broadcasted_iota(jnp.int32, sq.shape, 1)
            masked = jnp.where(tidx < remaining, sq, 0.0)
            acc_ref[0] = acc_ref[0] + jnp.sum(masked, axis=1)

        @pl.when(t != last_t)
        def _():
            acc_ref[0] = acc_ref[0] + jnp.sum(sq, axis=1)
    else:
        acc_ref[0] = acc_ref[0] + jnp.sum(sq, axis=1)


def mse_loss_mix(output, target):
    """output: (16, T, 39) f32, target: (32, T, 39) f32 -> scalar f32 loss."""
    frames, t_total, width = output.shape
    assert frames == HALF_FRAMES and width == THREE_AXES
    assert target.shape == (2 * HALF_FRAMES, t_total, THREE_AXES)

    t_blk = _pick_t_blk(t_total)
    n_blocks = pl.cdiv(t_total, t_blk)
    needs_mask = (n_blocks * t_blk) != t_total

    kernel = functools.partial(
        _mse_mix_kernel, t_total=t_total, t_blk=t_blk, needs_mask=needs_mask)

    blk = (FRAME_BLK, t_blk, THREE_AXES)
    partials = pl.pallas_call(
        kernel,
        out_shape=jax.ShapeDtypeStruct((2, FRAME_BLK, THREE_AXES), jnp.float32),
        grid_spec=pltpu.PrefetchScalarGridSpec(
            num_scalar_prefetch=0,
            grid=(2, n_blocks),
            in_specs=[
                # output frames [8c, 8c+8)
                pl.BlockSpec(blk, lambda c, t: (c, t, 0)),
                # target primary-event frames [8c, 8c+8)
                pl.BlockSpec(blk, lambda c, t: (c, t, 0)),
                # target mixed-in-event frames [16+8c, 16+8c+8)
                pl.BlockSpec(blk, lambda c, t: (c + 2, t, 0)),
            ],
            # Per-core (8, 39) partial-sum accumulator, revisited across the
            # "arbitrary" time axis.
            out_specs=pl.BlockSpec((1, FRAME_BLK, THREE_AXES),
                                   lambda c, t: (c, 0, 0)),
        ),
        compiler_params=pltpu.CompilerParams(
            dimension_semantics=("parallel", "arbitrary"),
            vmem_limit_bytes=VMEM_LIMIT_BYTES,
        ),
    )(output, target, target)

    inv_n = 1.0 / float(HALF_FRAMES * t_total * THREE_AXES)
    return jnp.sum(partials) * inv_n


def _reference(output, target):
    t_first, t_m = target[:HALF_FRAMES], target[HALF_FRAMES:]
    tx, ty, tz = (t_first[..., :13], t_first[..., 13:26], t_first[..., 26:39])
    txm, tym, tzm = (t_m[..., :13], t_m[..., 13:26], t_m[..., 26:39])
    s = jnp.sqrt(tx**2 + ty**2 + tz**2) + jnp.sqrt(txm**2 + tym**2 + tzm**2)
    gate = jnp.where((s < 0.5) | (s > 1.5), 0.0, 1.0)
    gate3 = jnp.concatenate([gate, gate, gate], axis=-1)
    target_mix = t_first + gate3 * t_m
    return jnp.mean((output - target_mix) ** 2)


if __name__ == "__main__":
    key = jax.random.PRNGKey(0)
    k1, k2, k3, k4 = jax.random.split(key, 4)

    # Small shapes consistent with the module: output (16, T, 39); target
    # stacks two 16-frame halves -> (32, T, 39).  T = 8 time steps.
    T = 8
    output = jax.random.normal(
        k1, (HALF_FRAMES, T, THREE_AXES), dtype=jnp.float32)
    # uniform in [0, 1) so the gate takes both 0 and 1 values
    target = jax.random.uniform(
        k2, (2 * HALF_FRAMES, T, THREE_AXES), dtype=jnp.float32)

    loss = mse_loss_mix(output, target)
    jax.block_until_ready(loss)
    ref = _reference(output, target)
    assert np.allclose(np.asarray(loss), np.asarray(ref),
                       rtol=1e-5, atol=1e-6), (float(loss), float(ref))

    # Larger T: exercises the multi-block grid and the masked tail block.
    T2 = 520
    output2 = jax.random.normal(
        k3, (HALF_FRAMES, T2, THREE_AXES), dtype=jnp.float32)
    target2 = jax.random.uniform(
        k4, (2 * HALF_FRAMES, T2, THREE_AXES), dtype=jnp.float32)
    loss2 = mse_loss_mix(output2, target2)
    jax.block_until_ready(loss2)
    ref2 = _reference(output2, target2)
    assert np.allclose(np.asarray(loss2), np.asarray(ref2),
                       rtol=1e-4, atol=1e-6), (float(loss2), float(ref2))

    print("KERNEL_OK")
</pallas_src>

<mosaic_0001>
module attributes {stable_mosaic.version = 11 : i64} {
  func.func @_mse_mix_kernel(%arg0: i32, %arg1: i32, %arg2: memref<8x8x39xf32, #tpu.memory_space<vmem>>, %arg3: memref<8x8x39xf32, #tpu.memory_space<vmem>>, %arg4: memref<8x8x39xf32, #tpu.memory_space<vmem>>, %arg5: memref<1x8x39xf32, #tpu.memory_space<vmem>>) attributes {dimension_semantics = [#tpu.dimension_semantics<parallel>, #tpu.dimension_semantics<arbitrary>], iteration_bounds = array<i64: 2, 1>, scalar_prefetch = 0 : i64, scratch_operands = 0 : i64, tpu.core_type = #tpu.core_type<tc>, window_params = [{transform_indices = @transform_0, window_bounds = array<i64: 8, 8, 39>}, {transform_indices = @transform_1, window_bounds = array<i64: 8, 8, 39>}, {transform_indices = @transform_2, window_bounds = array<i64: 8, 8, 39>}, {transform_indices = @transform_3, window_bounds = array<i64: 1, 8, 39>}]} {
    %c0_i32 = arith.constant 0 : i32
    %0 = arith.cmpi eq, %arg1, %c0_i32 : i32
    %1 = arith.extui %0 : i1 to i32
    %c0_i32_0 = arith.constant 0 : i32
    %2 = arith.cmpi ne, %1, %c0_i32_0 : i32
    scf.if %2 {
      %cst_18 = arith.constant 0.000000e+00 : f32
      %39 = vector.broadcast %cst_18 : f32 to vector<1x8x39xf32>
      %c0_19 = arith.constant 0 : index
      %c0_20 = arith.constant 0 : index
      %c0_21 = arith.constant 0 : index
      %40 = vector.load %arg5[%c0_19, %c0_20, %c0_21] : memref<1x8x39xf32, #tpu.memory_space<vmem>>, vector<1x8x39xf32>
      tpu.vector_store %arg5[%c0_19, %c0_20, %c0_21], %39 {strides = array<i32>} : memref<1x8x39xf32, #tpu.memory_space<vmem>>, vector<1x8x39xf32>,
    } else {
    }
    %c0 = arith.constant 0 : index
    %c0_1 = arith.constant 0 : index
    %c0_2 = arith.constant 0 : index
    %3 = vector.load %arg2[%c0, %c0_1, %c0_2] : memref<8x8x39xf32, #tpu.memory_space<vmem>>, vector<8x8x39xf32>
    %c0_3 = arith.constant 0 : index
    %c0_4 = arith.constant 0 : index
    %c0_5 = arith.constant 0 : index
    %4 = vector.load %arg3[%c0_3, %c0_4, %c0_5] : memref<8x8x39xf32, #tpu.memory_space<vmem>>, vector<8x8x39xf32>
    %c0_6 = arith.constant 0 : index
    %c0_7 = arith.constant 0 : index
    %c0_8 = arith.constant 0 : index
    %5 = vector.load %arg4[%c0_6, %c0_7, %c0_8] : memref<8x8x39xf32, #tpu.memory_space<vmem>>, vector<8x8x39xf32>
    %6 = arith.mulf %4, %4 : vector<8x8x39xf32>
    %7 = arith.mulf %5, %5 : vector<8x8x39xf32>
    %8 = vector.extract_strided_slice %6 {offsets = [0, 0, 0], sizes = [8, 8, 13], strides = [1, 1, 1]} : vector<8x8x39xf32> to vector<8x8x13xf32>
    %9 = vector.extract_strided_slice %6 {offsets = [0, 0, 13], sizes = [8, 8, 13], strides = [1, 1, 1]} : vector<8x8x39xf32> to vector<8x8x13xf32>
    %10 = arith.addf %8, %9 : vector<8x8x13xf32>
    %11 = vector.extract_strided_slice %6 {offsets = [0, 0, 26], sizes = [8, 8, 13], strides = [1, 1, 1]} : vector<8x8x39xf32> to vector<8x8x13xf32>
    %12 = arith.addf %10, %11 : vector<8x8x13xf32>
    %13 = math.sqrt %12 : vector<8x8x13xf32>
    %14 = vector.extract_strided_slice %7 {offsets = [0, 0, 0], sizes = [8, 8, 13], strides = [1, 1, 1]} : vector<8x8x39xf32> to vector<8x8x13xf32>
    %15 = vector.extract_strided_slice %7 {offsets = [0, 0, 13], sizes = [8, 8, 13], strides = [1, 1, 1]} : vector<8x8x39xf32> to vector<8x8x13xf32>
    %16 = arith.addf %14, %15 : vector<8x8x13xf32>
    %17 = vector.extract_strided_slice %7 {offsets = [0, 0, 26], sizes = [8, 8, 13], strides = [1, 1, 1]} : vector<8x8x39xf32> to vector<8x8x13xf32>
    %18 = arith.addf %16, %17 : vector<8x8x13xf32>
    %19 = math.sqrt %18 : vector<8x8x13xf32>
    %20 = arith.addf %13, %19 : vector<8x8x13xf32>
    %21 = tpu.concatenate %20, %20, %20 in 2 : vector<8x8x13xf32>, vector<8x8x13xf32>, vector<8x8x13xf32> -> vector<8x8x39xf32>
    %cst = arith.constant 5.000000e-01 : f32
    %22 = vector.broadcast %cst : f32 to vector<8x8x39xf32>
    %23 = arith.cmpf oge, %21, %22 : vector<8x8x39xf32>
    %cst_9 = arith.constant 1.500000e+00 : f32
    %24 = vector.broadcast %cst_9 : f32 to vector<8x8x39xf32>
    %25 = arith.cmpf ole, %21, %24 : vector<8x8x39xf32>
    %26 = arith.andi %23, %25 : vector<8x8x39xi1>
    %cst_10 = arith.constant 0.000000e+00 : f32
    %27 = vector.broadcast %cst_10 : f32 to vector<8x8x39xf32>
    %28 = arith.select %26, %5, %27 : vector<8x8x39xi1>, vector<8x8x39xf32>
    %29 = arith.addf %4, %28 : vector<8x8x39xf32>
    %30 = arith.subf %3, %29 : vector<8x8x39xf32>
    %31 = arith.mulf %30, %30 : vector<8x8x39xf32>
    %c0_11 = arith.constant 0 : index
    %c0_12 = arith.constant 0 : index
    %c0_13 = arith.constant 0 : index
    %32 = vector.load %arg5[%c0_11, %c0_12, %c0_13] : memref<1x8x39xf32, #tpu.memory_space<vmem>>, vector<1x8x39xf32>
    %33 = vector.shape_cast %32 : vector<1x8x39xf32> to vector<8x39xf32>
    %cst_14 = arith.constant dense<0.000000e+00> : vector<8x39xf32>
    %34 = vector.multi_reduction <add>, %31, %cst_14 [1] : vector<8x8x39xf32> to vector<8x39xf32>
    %35 = arith.addf %33, %34 : vector<8x39xf32>
    %c0_15 = arith.constant 0 : index
    %c0_16 = arith.constant 0 : index
    %c0_17 = arith.constant 0 : index
    %36 = vector.load %arg5[%c0_15, %c0_16, %c0_17] : memref<1x8x39xf32, #tpu.memory_space<vmem>>, vector<1x8x39xf32>
    %37 = vector.shape_cast %36 : vector<1x8x39xf32> to vector<8x39xf32>
    %38 = vector.shape_cast %35 : vector<8x39xf32> to vector<1x8x39xf32>
    tpu.vector_store %arg5[%c0_15, %c0_16, %c0_17], %38 {strides = array<i32>} : memref<1x8x39xf32, #tpu.memory_space<vmem>>, vector<1x8x39xf32>,
    return
  }
  func.func @transform_0(%arg0: i32, %arg1: i32) -> (i32, i32, i32) {
    %c0_i32 = arith.constant 0 : i32
    %c0_i32_0 = arith.constant 0 : i32
    return %arg0, %arg1, %c0_i32 : i32, i32, i32
  }
  func.func @transform_1(%arg0: i32, %arg1: i32) -> (i32, i32, i32) {
    %c0_i32 = arith.constant 0 : i32
    %c0_i32_0 = arith.constant 0 : i32
    return %arg0, %arg1, %c0_i32 : i32, i32, i32
  }
  func.func @transform_2(%arg0: i32, %arg1: i32) -> (i32, i32, i32) {
    %c2_i32 = arith.constant 2 : i32
    %0 = arith.addi %arg0, %c2_i32 : i32
    %c0_i32 = arith.constant 0 : i32
    %c0_i32_0 = arith.constant 0 : i32
    return %0, %arg1, %c0_i32 : i32, i32, i32
  }
  func.func @transform_3(%arg0: i32, %arg1: i32) -> (i32, i32, i32) {
    %c0_i32 = arith.constant 0 : i32
    %c0_i32_0 = arith.constant 0 : i32
    %c0_i32_1 = arith.constant 0 : i32
    return %arg0, %c0_i32, %c0_i32_0 : i32, i32, i32
  }
}

</mosaic_0001>

<llo_original>
// kernel: tpu_custom_call.1
$region0: #{tpu_custom_call.1}
  #allocation0 [shape = 'u32[]', space=smem, size = 0x4, offset = 0x4, fixed_abs, tag = 'smem constant byte address 0x4 - core index']
  #allocation1 [shape = 'u32[144,128]{1,0:T(1,128)}', space=vmem, size = 0x12000, scoped, tag = 'internal scratch']
  %s0 = inlined_call_operand.hbm [shape: f32[16,8,39], index: 0, kind: input, shape index: {}]
  %s1 = inlined_call_operand.hbm [shape: f32[32,8,39], index: 1, kind: input, shape index: {}]
  %s2 = inlined_call_operand.hbm [shape: f32[32,8,39], index: 2, kind: input, shape index: {}]
  %s3 = inlined_call_operand.hbm [shape: f32[2,8,39], index: 3, kind: output, shape index: {}]
  %s4 = sld [smem:[#allocation0]]
  $region61: #{tpu_custom_call.1} parent=0
    _
  %s6 = ssub.s32 1, %s4
  %s7 = scalar_select 0, %s6, %s4
  $region1: #{tpu_custom_call.1} parent=0
    #allocation2 [shape = 'u8[65536]{0}', space=vmem, size = 0x10000, scoped, tag = 'input window, operand 0']
    #allocation3 [shape = 's32[2]{0}', space=sflag, size = 0x8, scoped, tag = 'scoped memory for tpu_custom_call.1']
    #allocation4 [shape = 's32[2]{0}', space=sflag, size = 0x8, scoped, tag = 'scoped memory for tpu_custom_call.1']
    #allocation5 [shape = 'u8[65536]{0}', space=vmem, size = 0x10000, scoped, tag = 'input window, operand 1']
    #allocation6 [shape = 's32[2]{0}', space=sflag, size = 0x8, scoped, tag = 'scoped memory for tpu_custom_call.1']
    #allocation7 [shape = 'u8[65536]{0}', space=vmem, size = 0x10000, scoped, tag = 'input window, operand 2']
    #allocation8 [shape = 'u8[8192]{0}', space=vmem, size = 0x2000, scoped, tag = 'output window, operand 0']
    %8 = vsyncpa [#allocation3], 0
    %s9 = scalar_lea.sflag [#allocation3], 1
    %10 = vsyncpa %s9, 0
    %11 = vsyncpa [#allocation6], 0
    %s12 = scalar_lea.sflag [#allocation6], 1
    %13 = vsyncpa %s12, 0
    %14 = vsyncpa [#allocation4], 0
    %s15 = scalar_lea.sflag [#allocation4], 1
    %16 = vsyncpa %s15, 0
    loop: start=0, step=1, limit=4
    $region2: #{tpu_custom_call.1} parent=1 // loop_pre_header
      _
    $region3: #{tpu_custom_call.1} parent=1 // loop_header
      %s18 = sphi 0, %s22
      %p19 = scmp.ge.s32.totalorder %s18, 4
      %s25 = sphi 0, %s37
      %s26 = sphi 0, %s33
      %s27 = sphi 0, %s25
      %s28 = sphi 0, %s26
      %s29 = sphi 0, %s27
      %s30 = sphi 0, %s28
      %s42 = sphi 0, %s44
      %s45 = sphi 0, %s42
      %s46 = sphi 0, %s45
      %s62 = sphi 0, %s46
      %s70 = sphi 0, %s72
      %s73 = sphi 0, %s70
      %s74 = sphi 0, %s73
      %s90 = sphi 0, %s74
      %s100 = sphi 0, %s102
      %s103 = sphi 0, %s100
      %s104 = sphi 0, %s103
      %s120 = sphi 0, %s104
      %s126 = sphi 0, %s128
      %s129 = sphi 0, %s126
      %s130 = sphi 0, %s129
      %s146 = sphi 0, %s130
    $region4: #{tpu_custom_call.1} parent=1 // loop_header_branch
      %21 = sbr.rel (%p19) target = $region8
    $region5: #{tpu_custom_call.1} parent=1 // loop_body
      %s23 = ssub.s32 %s18, 1
      %s24 = ssub.s32 %s18, 2
      %s31 = sadd.s32 1, %s26
      %p32 = scmp.ge.s32.totalorder %s31, 1
      %s33 = scalar_select %p32, 0, %s31
      %s34 = sadd.s32 1, %s25
      %s35 = scalar_select %p32, %s34, %s25
      %p36 = scmp.ge.s32.totalorder %s35, 2
      %s37 = scalar_select %p36, 0, %s35
      %s38 = ssub.s32 %s25, %s37
      %s39 = ssub.s32 %s26, %s33
      %s40 = sor.u32 %s38, %s39
      %p41 = scmp.eq.s32.totalorder %s40, 0
      %s43 = sadd.s32 %s42, 1
      %s44 = scalar_select %p41, %s42, %s43
      %p47 = pneg %p41
      %p48 = scmp.eq.s32.totalorder %s18, 1
      %p49 = por %p47, %p48
      %p50 = scmp.ne.s32.totalorder %s42, %s45
      %p51 = scmp.eq.s32.totalorder %s18, 0
      %p52 = por %p50, %p51
      %p53 = scmp.ne.s32.totalorder %s42, %s45
      %p54 = scmp.eq.s32.totalorder %s23, 1
      %p55 = por %p53, %p54
      %p56 = scmp.ne.s32.totalorder %s45, %s46
      %p57 = scmp.eq.s32.totalorder %s23, 0
      %p58 = por %p56, %p57
      %p59 = scmp.ne.s32.totalorder %s45, %s46
      %p60 = scmp.eq.s32.totalorder %s24, 1
      %p61 = por %p59, %p60
      %p63 = scmp.ne.s32.totalorder %s46, %s62
      %p64 = scmp.eq.s32.totalorder %s24, 0
      %p65 = por %p63, %p64
      %s66 = ssub.s32 %s25, %s37
      %s67 = ssub.s32 %s26, %s33
      %s68 = sor.u32 %s66, %s67
      %p69 = scmp.eq.s32.totalorder %s68, 0
      %s71 = sadd.s32 %s70, 1
      %s72 = scalar_select %p69, %s70, %s71
      %p75 = pneg %p69
      %p76 = scmp.eq.s32.totalorder %s18, 1
      %p77 = por %p75, %p76
      %p78 = scmp.ne.s32.totalorder %s70, %s73
      %p79 = scmp.eq.s32.totalorder %s18, 0
      %p80 = por %p78, %p79
      %p81 = scmp.ne.s32.totalorder %s70, %s73
      %p82 = scmp.eq.s32.totalorder %s23, 1
      %p83 = por %p81, %p82
      %p84 = scmp.ne.s32.totalorder %s73, %s74
      %p85 = scmp.eq.s32.totalorder %s23, 0
      %p86 = por %p84, %p85
      %p87 = scmp.ne.s32.totalorder %s73, %s74
      %p88 = scmp.eq.s32.totalorder %s24, 1
      %p89 = por %p87, %p88
      %p91 = scmp.ne.s32.totalorder %s74, %s90
      %p92 = scmp.eq.s32.totalorder %s24, 0
      %p93 = por %p91, %p92
      %s94 = sadd.s32 %s25, 2
      %s95 = sadd.s32 %s37, 2
      %s96 = ssub.s32 %s94, %s95
      %s97 = ssub.s32 %s26, %s33
      %s98 = sor.u32 %s96, %s97
      %p99 = scmp.eq.s32.totalorder %s98, 0
      %s101 = sadd.s32 %s100, 1
      %s102 = scalar_select %p99, %s100, %s101
      %p105 = pneg %p99
      %p106 = scmp.eq.s32.totalorder %s18, 1
      %p107 = por %p105, %p106
      %p108 = scmp.ne.s32.totalorder %s100, %s103
      %p109 = scmp.eq.s32.totalorder %s18, 0
      %p110 = por %p108, %p109
      %p111 = scmp.ne.s32.totalorder %s100, %s103
      %p112 = scmp.eq.s32.totalorder %s23, 1
      %p113 = por %p111, %p112
      %p114 = scmp.ne.s32.totalorder %s103, %s104
      %p115 = scmp.eq.s32.totalorder %s23, 0
      %p116 = por %p114, %p115
      %p117 = scmp.ne.s32.totalorder %s103, %s104
      %p118 = scmp.eq.s32.totalorder %s24, 1
      %p119 = por %p117, %p118
      %p121 = scmp.ne.s32.totalorder %s104, %s120
      %p122 = scmp.eq.s32.totalorder %s24, 0
      %p123 = por %p121, %p122
      %s124 = ssub.s32 %s25, %s37
      %p125 = scmp.eq.s32.totalorder %s124, 0
      %s127 = sadd.s32 %s126, 1
      %s128 = scalar_select %p125, %s126, %s127
      %p131 = pneg %p125
      %p132 = scmp.eq.s32.totalorder %s18, 1
      %p133 = por %p131, %p132
      %p134 = scmp.ne.s32.totalorder %s126, %s129
      %p135 = scmp.eq.s32.totalorder %s18, 0
      %p136 = por %p134, %p135
      %p137 = scmp.ne.s32.totalorder %s126, %s129
      %p138 = scmp.eq.s32.totalorder %s23, 1
      %p139 = por %p137, %p138
      %p140 = scmp.ne.s32.totalorder %s129, %s130
      %p141 = scmp.eq.s32.totalorder %s23, 0
      %p142 = por %p140, %p141
      %p143 = scmp.ne.s32.totalorder %s129, %s130
      %p144 = scmp.eq.s32.totalorder %s24, 1
      %p145 = por %p143, %p144
      %p147 = scmp.ne.s32.totalorder %s130, %s146
      %p148 = scmp.eq.s32.totalorder %s24, 0
      %p149 = por %p147, %p148
      %p150 = scmp.le.s32.totalorder 1, %s18
      %p151 = scmp.lt.s32.totalorder %s18, 3
      %p152 = pnand %p150, %p151
      %p153 = pneg %p152
      // Predicated region
      $region9: #{tpu_custom_call.1} parent=5 // pred_check
        _
      $region10: #{tpu_custom_call.1} parent=5 // pred_check_branch
        %155 = sbr.rel (%p152) target = $region12
      $region11: #{tpu_custom_call.1} parent=5 // pred_region
        %s156 = ssub.s32 %s18, 1
      $region12: #{tpu_custom_call.1} parent=5 // pred_fallthru
        _
      %p157 = scmp.lt.s32.totalorder %s18, 2
      // Predicated region
      $region13: #{tpu_custom_call.1} parent=5 // pred_check
        %p158 = pneg %p157
      $region14: #{tpu_custom_call.1} parent=5 // pred_check_branch
        %160 = sbr.rel (%p158) target = $region16
      $region15: #{tpu_custom_call.1} parent=5 // pred_region
        // Predicated region
        $region17: #{tpu_custom_call.1} parent=15 // pred_check
          %p161 = pneg %p52
        $region18: #{tpu_custom_call.1} parent=15 // pred_check_branch
          %163 = sbr.rel (%p161) target = $region20
        $region19: #{tpu_custom_call.1} parent=15 // pred_region
          %s164 = sand.u32 %s42, 1
          %s165 = scalar_lea.sflag [#allocation3], %s164
          %s166 = sand.u32 %s42, 1
          %s167 = smul.addr %s166, 64
          %s168 = scalar_lea.vmem [#allocation2], %s167
          %s169 = smul.u32 8, %s25
          %s171 = ssub.s32 1024, 1024
          %172 = vsyncadd %s165, %s171
          %s173 = sadd.s32 %s26, %s169
          %s174 = smul.addr %s173, 128
          %s175 = scalar_lea.hbm %s0, %s174
          %s176 = sshll.u32 %s168, 4
          %s177 = int_to_ptr.vmem [resolvable:$true] %s176
          %182 = dma.hbm_to_vmem [thread:$0]  %s175, 1024, %s177, %s165, 128, 128, 8
        $region20: #{tpu_custom_call.1} parent=15 // pred_fallthru
          _
        // Predicated region
        $region21: #{tpu_custom_call.1} parent=15 // pred_check
          %p183 = pneg %p80
        $region22: #{tpu_custom_call.1} parent=15 // pred_check_branch
          %185 = sbr.rel (%p183) target = $region24
        $region23: #{tpu_custom_call.1} parent=15 // pred_region
          %s186 = sand.u32 %s18, 1
          %s187 = scalar_lea.sflag [#allocation6], %s186
          %s188 = sand.u32 %s70, 1
          %s189 = smul.addr %s188, 64
          %s190 = scalar_lea.vmem [#allocation5], %s189
          %s191 = smul.u32 8, %s25
          %s193 = ssub.s32 1024, 1024
          %194 = vsyncadd %s187, %s193
          %s195 = sadd.s32 %s26, %s191
          %s196 = smul.addr %s195, 128
          %s197 = scalar_lea.hbm %s1, %s196
          %s198 = sshll.u32 %s190, 4
          %s199 = int_to_ptr.vmem [resolvable:$true] %s198
          %204 = dma.hbm_to_vmem [thread:$0]  %s197, 1024, %s199, %s187, 128, 128, 8
        $region24: #{tpu_custom_call.1} parent=15 // pred_fallthru
          _
        // Predicated region
        $region25: #{tpu_custom_call.1} parent=15 // pred_check
          %p205 = pneg %p110
        $region26: #{tpu_custom_call.1} parent=15 // pred_check_branch
          %207 = sbr.rel (%p205) target = $region28
        $region27: #{tpu_custom_call.1} parent=15 // pred_region
          %s208 = sand.u32 %s18, 1
          %s209 = scalar_lea.sflag [#allocation6], %s208
          %s210 = sand.u32 %s100, 1
          %s211 = smul.addr %s210, 64
          %s212 = scalar_lea.vmem [#allocation7], %s211
          %s213 = sadd.s32 %s25, 2
          %s214 = smul.u32 8, %s213
          %s216 = ssub.s32 1024, 1024
          %217 = vsyncadd %s209, %s216
          %s218 = sadd.s32 %s26, %s214
          %s219 = smul.addr %s218, 128
          %s220 = scalar_lea.hbm %s2, %s219
          %s221 = sshll.u32 %s212, 4
          %s222 = int_to_ptr.vmem [resolvable:$true] %s221
          %227 = dma.hbm_to_vmem [thread:$0]  %s220, 1024, %s222, %s209, 128, 128, 8
        $region28: #{tpu_custom_call.1} parent=15 // pred_fallthru
          _
      $region16: #{tpu_custom_call.1} parent=5 // pred_fallthru
        _
      %p228 = scmp.le.s32.totalorder 1, %s18
      %p229 = scmp.lt.s32.totalorder %s18, 3
      %p230 = pnand %p228, %p229
      %p231 = pneg %p230
      // Predicated region
      $region29: #{tpu_custom_call.1} parent=5 // pred_check
        _
      $region30: #{tpu_custom_call.1} parent=5 // pred_check_branch
        %233 = sbr.rel (%p230) target = $region32
      $region31: #{tpu_custom_call.1} parent=5 // pred_region
        %s234 = ssub.s32 %s18, 1
        %s235 = sand.u32 %s45, 1
        %s236 = scalar_lea.sflag [#allocation3], %s235
        %s237 = sand.u32 %s45, 1
        %s238 = smul.addr %s237, 64
        %s239 = scalar_lea.vmem [#allocation2], %s238
        // Predicated region
        $region33: #{tpu_custom_call.1} parent=31 // pred_check
          %p240 = pneg %p58
        $region34: #{tpu_custom_call.1} parent=31 // pred_check_branch
          %242 = sbr.rel (%p240) target = $region36
        $region35: #{tpu_custom_call.1} parent=31 // pred_region
          %243 = dma.done %s236, 1024
        $region36: #{tpu_custom_call.1} parent=31 // pred_fallthru
          _
        %s244 = sand.u32 %s23, 1
        %s245 = scalar_lea.sflag [#allocation6], %s244
        %s246 = sand.u32 %s73, 1
        %s247 = smul.addr %s246, 64
        %s248 = scalar_lea.vmem [#allocation5], %s247
        // Predicated region
        $region37: #{tpu_custom_call.1} parent=31 // pred_check
          %p249 = pneg %p86
        $region38: #{tpu_custom_call.1} parent=31 // pred_check_branch
          %251 = sbr.rel (%p249) target = $region40
        $region39: #{tpu_custom_call.1} parent=31 // pred_region
          %252 = dma.done %s245, 1024
        $region40: #{tpu_custom_call.1} parent=31 // pred_fallthru
          _
        %s253 = sand.u32 %s23, 1
        %s254 = scalar_lea.sflag [#allocation6], %s253
        %s255 = sand.u32 %s103, 1
        %s256 = smul.addr %s255, 64
        %s257 = scalar_lea.vmem [#allocation7], %s256
        // Predicated region
        $region41: #{tpu_custom_call.1} parent=31 // pred_check
          %p258 = pneg %p116
        $region42: #{tpu_custom_call.1} parent=31 // pred_check_branch
          %260 = sbr.rel (%p258) target = $region44
        $region43: #{tpu_custom_call.1} parent=31 // pred_region
          %261 = dma.done %s254, 1024
        $region44: #{tpu_custom_call.1} parent=31 // pred_fallthru
          _
        %s262 = sand.u32 %s45, 1
        %s263 = scalar_lea.sflag [#allocation3], %s262
        %s264 = sand.u32 %s45, 1
        %s265 = smul.addr %s264, 64
        %s266 = scalar_lea.vmem [#allocation2], %s265
        %p267 = pneg %p58
        %p268 = pneg %p55
        %s269 = sand.u32 %s23, 1
        %s270 = scalar_lea.sflag [#allocation6], %s269
        %s271 = sand.u32 %s73, 1
        %s272 = smul.addr %s271, 64
        %s273 = scalar_lea.vmem [#allocation5], %s272
        %p274 = pneg %p86
        %p275 = pneg %p83
        %s276 = sand.u32 %s23, 1
        %s277 = scalar_lea.sflag [#allocation6], %s276
        %s278 = sand.u32 %s103, 1
        %s279 = smul.addr %s278, 64
        %s280 = scalar_lea.vmem [#allocation7], %s279
        %p281 = pneg %p116
        %p282 = pneg %p113
        %p283 = pneg %p142
        %p284 = pneg %p139
        %s285 = sand.u32 %s129, 1
        %s286 = scalar_lea.sflag [#allocation4], %s285
        %s287 = sand.u32 %s129, 1
        %s288 = smul.addr %s287, 8
        %s289 = scalar_lea.vmem [#allocation8], %s288
        %s290 = smul.u32 8, %s27
        %s291 = smul.u32 8, %s27
        %s292 = sadd.s32 %s27, 2
        %s293 = smul.u32 8, %s292
        %p294 = scmp.eq.s32.totalorder %s28, 0
        // Predicated region
        $region45: #{tpu_custom_call.1} parent=31 // pred_check
          %p295 = pneg %p294
        $region46: #{tpu_custom_call.1} parent=31 // pred_check_branch
          %297 = sbr.rel (%p295) target = $region48
        $region47: #{tpu_custom_call.1} parent=31 // pred_region
          %vm298 = vcmask 318464
          %299 = vst.msk [vmem:[%s289] sm:$0xff] %vm298, 0.0
        $region48: #{tpu_custom_call.1} parent=31 // pred_fallthru
          _
        %v300 = vld [vmem:[%s239] sm:$0xff]
        %v301 = vld [vmem:[%s239 + $0x8] sm:$0xff]
        %v302 = vld [vmem:[%s239 + $0x10] sm:$0xff]
        %v303 = vld [vmem:[%s239 + $0x18] sm:$0xff]
        %v304 = vld [vmem:[%s239 + $0x20] sm:$0xff]
        %v305 = vld [vmem:[%s239 + $0x28] sm:$0xff]
        %v306 = vld [vmem:[%s239 + $0x30] sm:$0xff]
        %v307 = vld [vmem:[%s239 + $0x38] sm:$0xff]
        %v308 = vld [vmem:[%s248] sm:$0xff]
        %v309 = vld [vmem:[%s248 + $0x8] sm:$0xff]
        %v310 = vld [vmem:[%s248 + $0x10] sm:$0xff]
        %v311 = vld [vmem:[%s248 + $0x18] sm:$0xff]
        %v312 = vld [vmem:[%s248 + $0x20] sm:$0xff]
        %v313 = vld [vmem:[%s248 + $0x28] sm:$0xff]
        %v314 = vld [vmem:[%s248 + $0x30] sm:$0xff]
        %v315 = vld [vmem:[%s248 + $0x38] sm:$0xff]
        %v316 = vld [vmem:[%s257] sm:$0xff]
        %v317 = vld [vmem:[%s257 + $0x8] sm:$0xff]
        %v318 = vld [vmem:[%s257 + $0x10] sm:$0xff]
        %v319 = vld [vmem:[%s257 + $0x18] sm:$0xff]
        %v320 = vld [vmem:[%s257 + $0x20] sm:$0xff]
        %v321 = vld [vmem:[%s257 + $0x28] sm:$0xff]
        %v322 = vld [vmem:[%s257 + $0x30] sm:$0xff]
        %v323 = vld [vmem:[%s257 + $0x38] sm:$0xff]
        %v324 = vmul.f32 %v308, %v308
        %v325 = vmul.f32 %v309, %v309
        %v326 = vmul.f32 %v310, %v310
        %v327 = vmul.f32 %v311, %v311
        %v328 = vmul.f32 %v312, %v312
        %v329 = vmul.f32 %v313, %v313
        %v330 = vmul.f32 %v314, %v314
        %v331 = vmul.f32 %v315, %v315
        %v332 = vmul.f32 %v316, %v316
        %v333 = vmul.f32 %v317, %v317
        %v334 = vmul.f32 %v318, %v318
        %v335 = vmul.f32 %v319, %v319
        %v336 = vmul.f32 %v320, %v320
        %v337 = vmul.f32 %v321, %v321
        %v338 = vmul.f32 %v322, %v322
        %v339 = vmul.f32 %v323, %v323
        %348 = vrot.lane.b32.xlu0 %v324, 115
        %v349 = vpop.permute.xlu0 %348
        %350 = vrot.lane.b32.xlu0 %v325, 115
        %v351 = vpop.permute.xlu0 %350
        %352 = vrot.lane.b32.xlu0 %v326, 115
        %v353 = vpop.permute.xlu0 %352
        %354 = vrot.lane.b32.xlu0 %v327, 115
        %v355 = vpop.permute.xlu0 %354
        %356 = vrot.lane.b32.xlu0 %v328, 115
        %v357 = vpop.permute.xlu0 %356
        %358 = vrot.lane.b32.xlu0 %v329, 115
        %v359 = vpop.permute.xlu0 %358
        %360 = vrot.lane.b32.xlu0 %v330, 115
        %v361 = vpop.permute.xlu0 %360
        %362 = vrot.lane.b32.xlu0 %v331, 115
        %v363 = vpop.permute.xlu0 %362
        %v372 = vadd.f32 %v324, %v349
        %v373 = vadd.f32 %v325, %v351
        %v374 = vadd.f32 %v326, %v353
        %v375 = vadd.f32 %v327, %v355
        %v376 = vadd.f32 %v328, %v357
        %v377 = vadd.f32 %v329, %v359
        %v378 = vadd.f32 %v330, %v361
        %v379 = vadd.f32 %v331, %v363
        %380 = vrot.lane.b32.xlu0 %v324, 102
        %v381 = vpop.permute.xlu0 %380
        %382 = vrot.lane.b32.xlu0 %v325, 102
        %v383 = vpop.permute.xlu0 %382
        %384 = vrot.lane.b32.xlu0 %v326, 102
        %v385 = vpop.permute.xlu0 %384
        %386 = vrot.lane.b32.xlu0 %v327, 102
        %v387 = vpop.permute.xlu0 %386
        %388 = vrot.lane.b32.xlu0 %v328, 102
        %v389 = vpop.permute.xlu0 %388
        %390 = vrot.lane.b32.xlu0 %v329, 102
        %v391 = vpop.permute.xlu0 %390
        %392 = vrot.lane.b32.xlu0 %v330, 102
        %v393 = vpop.permute.xlu0 %392
        %394 = vrot.lane.b32.xlu0 %v331, 102
        %v395 = vpop.permute.xlu0 %394
        %v404 = vadd.f32 %v372, %v381
        %v405 = vadd.f32 %v373, %v383
        %v406 = vadd.f32 %v374, %v385
        %v407 = vadd.f32 %v375, %v387
        %v408 = vadd.f32 %v376, %v389
        %v409 = vadd.f32 %v377, %v391
        %v410 = vadd.f32 %v378, %v393
        %v411 = vadd.f32 %v379, %v395
        %v412 = vrsqrt.pop %v404
        %v413 = vmul.f32 %v404, %v412
        %vm414 = vcmp.eq.f32.partialorder %v404, inf
        %v415 = vsel %vm414, %v404, %v413
        %vm416 = vcmp.eq.f32.partialorder %v404, 0.0
        %v417 = vand.u32 %v404, 2147483648
        %v418 = vsel %vm416, %v417, %v415
        %v419 = vrsqrt.pop %v405
        %v420 = vmul.f32 %v405, %v419
        %vm421 = vcmp.eq.f32.partialorder %v405, inf
        %v422 = vsel %vm421, %v405, %v420
        %vm423 = vcmp.eq.f32.partialorder %v405, 0.0
        %v424 = vand.u32 %v405, 2147483648
        %v425 = vsel %vm423, %v424, %v422
        %v426 = vrsqrt.pop %v406
        %v427 = vmul.f32 %v406, %v426
        %vm428 = vcmp.eq.f32.partialorder %v406, inf
        %v429 = vsel %vm428, %v406, %v427
        %vm430 = vcmp.eq.f32.partialorder %v406, 0.0
        %v431 = vand.u32 %v406, 2147483648
        %v432 = vsel %vm430, %v431, %v429
        %v433 = vrsqrt.pop %v407
        %v434 = vmul.f32 %v407, %v433
        %vm435 = vcmp.eq.f32.partialorder %v407, inf
        %v436 = vsel %vm435, %v407, %v434
        %vm437 = vcmp.eq.f32.partialorder %v407, 0.0
        %v438 = vand.u32 %v407, 2147483648
        %v439 = vsel %vm437, %v438, %v436
        %v440 = vrsqrt.pop %v408
        %v441 = vmul.f32 %v408, %v440
        %vm442 = vcmp.eq.f32.partialorder %v408, inf
        %v443 = vsel %vm442, %v408, %v441
        %vm444 = vcmp.eq.f32.partialorder %v408, 0.0
        %v445 = vand.u32 %v408, 2147483648
        %v446 = vsel %vm444, %v445, %v443
        %v447 = vrsqrt.pop %v409
        %v448 = vmul.f32 %v409, %v447
        %vm449 = vcmp.eq.f32.partialorder %v409, inf
        %v450 = vsel %vm449, %v409, %v448
        %vm451 = vcmp.eq.f32.partialorder %v409, 0.0
        %v452 = vand.u32 %v409, 2147483648
        %v453 = vsel %vm451, %v452, %v450
        %v454 = vrsqrt.pop %v410
        %v455 = vmul.f32 %v410, %v454
        %vm456 = vcmp.eq.f32.partialorder %v410, inf
        %v457 = vsel %vm456, %v410, %v455
        %vm458 = vcmp.eq.f32.partialorder %v410, 0.0
        %v459 = vand.u32 %v410, 2147483648
        %v460 = vsel %vm458, %v459, %v457
        %v461 = vrsqrt.pop %v411
        %v462 = vmul.f32 %v411, %v461
        %vm463 = vcmp.eq.f32.partialorder %v411, inf
        %v464 = vsel %vm463, %v411, %v462
        %vm465 = vcmp.eq.f32.partialorder %v411, 0.0
        %v466 = vand.u32 %v411, 2147483648
        %v467 = vsel %vm465, %v466, %v464
        %476 = vrot.lane.b32.xlu0 %v332, 115
        %v477 = vpop.permute.xlu0 %476
        %478 = vrot.lane.b32.xlu0 %v333, 115
        %v479 = vpop.permute.xlu0 %478
        %480 = vrot.lane.b32.xlu0 %v334, 115
        %v481 = vpop.permute.xlu0 %480
        %482 = vrot.lane.b32.xlu0 %v335, 115
        %v483 = vpop.permute.xlu0 %482
        %484 = vrot.lane.b32.xlu0 %v336, 115
        %v485 = vpop.permute.xlu0 %484
        %486 = vrot.lane.b32.xlu0 %v337, 115
        %v487 = vpop.permute.xlu0 %486
        %488 = vrot.lane.b32.xlu0 %v338, 115
        %v489 = vpop.permute.xlu0 %488
        %490 = vrot.lane.b32.xlu0 %v339, 115
        %v491 = vpop.permute.xlu0 %490
        %v500 = vadd.f32 %v332, %v477
        %v501 = vadd.f32 %v333, %v479
        %v502 = vadd.f32 %v334, %v481
        %v503 = vadd.f32 %v335, %v483
        %v504 = vadd.f32 %v336, %v485
        %v505 = vadd.f32 %v337, %v487
        %v506 = vadd.f32 %v338, %v489
        %v507 = vadd.f32 %v339, %v491
        %508 = vrot.lane.b32.xlu0 %v332, 102
        %v509 = vpop.permute.xlu0 %508
        %510 = vrot.lane.b32.xlu0 %v333, 102
        %v511 = vpop.permute.xlu0 %510
        %512 = vrot.lane.b32.xlu0 %v334, 102
        %v513 = vpop.permute.xlu0 %512
        %514 = vrot.lane.b32.xlu0 %v335, 102
        %v515 = vpop.permute.xlu0 %514
        %516 = vrot.lane.b32.xlu0 %v336, 102
        %v517 = vpop.permute.xlu0 %516
        %518 = vrot.lane.b32.xlu0 %v337, 102
        %v519 = vpop.permute.xlu0 %518
        %520 = vrot.lane.b32.xlu0 %v338, 102
        %v521 = vpop.permute.xlu0 %520
        %522 = vrot.lane.b32.xlu0 %v339, 102
        %v523 = vpop.permute.xlu0 %522
        %v532 = vadd.f32 %v500, %v509
        %v533 = vadd.f32 %v501, %v511
        %v534 = vadd.f32 %v502, %v513
        %v535 = vadd.f32 %v503, %v515
        %v536 = vadd.f32 %v504, %v517
        %v537 = vadd.f32 %v505, %v519
        %v538 = vadd.f32 %v506, %v521
        %v539 = vadd.f32 %v507, %v523
        %v540 = vrsqrt.pop %v532
        %v541 = vmul.f32 %v532, %v540
        %vm542 = vcmp.eq.f32.partialorder %v532, inf
        %v543 = vsel %vm542, %v532, %v541
        %vm544 = vcmp.eq.f32.partialorder %v532, 0.0
        %v545 = vand.u32 %v532, 2147483648
        %v546 = vsel %vm544, %v545, %v543
        %v547 = vrsqrt.pop %v533
        %v548 = vmul.f32 %v533, %v547
        %vm549 = vcmp.eq.f32.partialorder %v533, inf
        %v550 = vsel %vm549, %v533, %v548
        %vm551 = vcmp.eq.f32.partialorder %v533, 0.0
        %v552 = vand.u32 %v533, 2147483648
        %v553 = vsel %vm551, %v552, %v550
        %v554 = vrsqrt.pop %v534
        %v555 = vmul.f32 %v534, %v554
        %vm556 = vcmp.eq.f32.partialorder %v534, inf
        %v557 = vsel %vm556, %v534, %v555
        %vm558 = vcmp.eq.f32.partialorder %v534, 0.0
        %v559 = vand.u32 %v534, 2147483648
        %v560 = vsel %vm558, %v559, %v557
        %v561 = vrsqrt.pop %v535
        %v562 = vmul.f32 %v535, %v561
        %vm563 = vcmp.eq.f32.partialorder %v535, inf
        %v564 = vsel %vm563, %v535, %v562
        %vm565 = vcmp.eq.f32.partialorder %v535, 0.0
        %v566 = vand.u32 %v535, 2147483648
        %v567 = vsel %vm565, %v566, %v564
        %v568 = vrsqrt.pop %v536
        %v569 = vmul.f32 %v536, %v568
        %vm570 = vcmp.eq.f32.partialorder %v536, inf
        %v571 = vsel %vm570, %v536, %v569
        %vm572 = vcmp.eq.f32.partialorder %v536, 0.0
        %v573 = vand.u32 %v536, 2147483648
        %v574 = vsel %vm572, %v573, %v571
        %v575 = vrsqrt.pop %v537
        %v576 = vmul.f32 %v537, %v575
        %vm577 = vcmp.eq.f32.partialorder %v537, inf
        %v578 = vsel %vm577, %v537, %v576
        %vm579 = vcmp.eq.f32.partialorder %v537, 0.0
        %v580 = vand.u32 %v537, 2147483648
        %v581 = vsel %vm579, %v580, %v578
        %v582 = vrsqrt.pop %v538
        %v583 = vmul.f32 %v538, %v582
        %vm584 = vcmp.eq.f32.partialorder %v538, inf
        %v585 = vsel %vm584, %v538, %v583
        %vm586 = vcmp.eq.f32.partialorder %v538, 0.0
        %v587 = vand.u32 %v538, 2147483648
        %v588 = vsel %vm586, %v587, %v585
        %v589 = vrsqrt.pop %v539
        %v590 = vmul.f32 %v539, %v589
        %vm591 = vcmp.eq.f32.partialorder %v539, inf
        %v592 = vsel %vm591, %v539, %v590
        %vm593 = vcmp.eq.f32.partialorder %v539, 0.0
        %v594 = vand.u32 %v539, 2147483648
        %v595 = vsel %vm593, %v594, %v592
        %v596 = vadd.f32 %v418, %v546
        %v597 = vadd.f32 %v425, %v553
        %v598 = vadd.f32 %v432, %v560
        %v599 = vadd.f32 %v439, %v567
        %v600 = vadd.f32 %v446, %v574
        %v601 = vadd.f32 %v453, %v581
        %v602 = vadd.f32 %v460, %v588
        %v603 = vadd.f32 %v467, %v595
        %612 = vrot.lane.b32.xlu0 %v596, 13
        %v613 = vpop.permute.xlu0 %612
        %614 = vrot.lane.b32.xlu0 %v597, 13
        %v615 = vpop.permute.xlu0 %614
        %616 = vrot.lane.b32.xlu0 %v598, 13
        %v617 = vpop.permute.xlu0 %616
        %618 = vrot.lane.b32.xlu0 %v599, 13
        %v619 = vpop.permute.xlu0 %618
        %620 = vrot.lane.b32.xlu0 %v600, 13
        %v621 = vpop.permute.xlu0 %620
        %622 = vrot.lane.b32.xlu0 %v601, 13
        %v623 = vpop.permute.xlu0 %622
        %624 = vrot.lane.b32.xlu0 %v602, 13
        %v625 = vpop.permute.xlu0 %624
        %626 = vrot.lane.b32.xlu0 %v603, 13
        %v627 = vpop.permute.xlu0 %626
        %636 = vrot.lane.b32.xlu0 %v596, 26
        %v637 = vpop.permute.xlu0 %636
        %638 = vrot.lane.b32.xlu0 %v597, 26
        %v639 = vpop.permute.xlu0 %638
        %640 = vrot.lane.b32.xlu0 %v598, 26
        %v641 = vpop.permute.xlu0 %640
        %642 = vrot.lane.b32.xlu0 %v599, 26
        %v643 = vpop.permute.xlu0 %642
        %644 = vrot.lane.b32.xlu0 %v600, 26
        %v645 = vpop.permute.xlu0 %644
        %646 = vrot.lane.b32.xlu0 %v601, 26
        %v647 = vpop.permute.xlu0 %646
        %648 = vrot.lane.b32.xlu0 %v602, 26
        %v649 = vpop.permute.xlu0 %648
        %650 = vrot.lane.b32.xlu0 %v603, 26
        %v651 = vpop.permute.xlu0 %650
        %vm660 = vcmask 105472
        %v661 = vsel %vm660, %v596, %v613
        %v662 = vsel %vm660, %v597, %v615
        %v663 = vsel %vm660, %v598, %v617
        %v664 = vsel %vm660, %v599, %v619
        %v665 = vsel %vm660, %v600, %v621
        %v666 = vsel %vm660, %v601, %v623
        %v667 = vsel %vm660, %v602, %v625
        %v668 = vsel %vm660, %v603, %v627
        %vm669 = vcmask 211968
        %v670 = vsel %vm669, %v661, %v637
        %v671 = vsel %vm669, %v662, %v639
        %v672 = vsel %vm669, %v663, %v641
        %v673 = vsel %vm669, %v664, %v643
        %v674 = vsel %vm669, %v665, %v645
        %v675 = vsel %vm669, %v666, %v647
        %v676 = vsel %vm669, %v667, %v649
        %v677 = vsel %vm669, %v668, %v651
        %vm678 = vcmp.ge.f32.partialorder %v670, 0.5
        %vm679 = vcmp.ge.f32.partialorder %v671, 0.5
        %vm680 = vcmp.ge.f32.partialorder %v672, 0.5
        %vm681 = vcmp.ge.f32.partialorder %v673, 0.5
        %vm682 = vcmp.ge.f32.partialorder %v674, 0.5
        %vm683 = vcmp.ge.f32.partialorder %v675, 0.5
        %vm684 = vcmp.ge.f32.partialorder %v676, 0.5
        %vm685 = vcmp.ge.f32.partialorder %v677, 0.5
        %vm686 = vcmp.le.f32.partialorder %v670, 1.5
        %vm687 = vcmp.le.f32.partialorder %v671, 1.5
        %vm688 = vcmp.le.f32.partialorder %v672, 1.5
        %vm689 = vcmp.le.f32.partialorder %v673, 1.5
        %vm690 = vcmp.le.f32.partialorder %v674, 1.5
        %vm691 = vcmp.le.f32.partialorder %v675, 1.5
        %vm692 = vcmp.le.f32.partialorder %v676, 1.5
        %vm693 = vcmp.le.f32.partialorder %v677, 1.5
        %vm694 = vmand %vm678, %vm686
        %vm695 = vmand %vm679, %vm687
        %vm696 = vmand %vm680, %vm688
        %vm697 = vmand %vm681, %vm689
        %vm698 = vmand %vm682, %vm690
        %vm699 = vmand %vm683, %vm691
        %vm700 = vmand %vm684, %vm692
        %vm701 = vmand %vm685, %vm693
        %v702 = vsel %vm694, %v316, 0.0
        %v703 = vsel %vm695, %v317, 0.0
        %v704 = vsel %vm696, %v318, 0.0
        %v705 = vsel %vm697, %v319, 0.0
        %v706 = vsel %vm698, %v320, 0.0
        %v707 = vsel %vm699, %v321, 0.0
        %v708 = vsel %vm700, %v322, 0.0
        %v709 = vsel %vm701, %v323, 0.0
        %v710 = vadd.f32 %v308, %v702
        %v711 = vadd.f32 %v309, %v703
        %v712 = vadd.f32 %v310, %v704
        %v713 = vadd.f32 %v311, %v705
        %v714 = vadd.f32 %v312, %v706
        %v715 = vadd.f32 %v313, %v707
        %v716 = vadd.f32 %v314, %v708
        %v717 = vadd.f32 %v315, %v709
        %v718 = vsub.f32 %v300, %v710
        %v719 = vsub.f32 %v301, %v711
        %v720 = vsub.f32 %v302, %v712
        %v721 = vsub.f32 %v303, %v713
        %v722 = vsub.f32 %v304, %v714
        %v723 = vsub.f32 %v305, %v715
        %v724 = vsub.f32 %v306, %v716
        %v725 = vsub.f32 %v307, %v717
        %v726 = vmul.f32 %v718, %v718
        %v727 = vmul.f32 %v719, %v719
        %v728 = vmul.f32 %v720, %v720
        %v729 = vmul.f32 %v721, %v721
        %v730 = vmul.f32 %v722, %v722
        %v731 = vmul.f32 %v723, %v723
        %v732 = vmul.f32 %v724, %v724
        %v733 = vmul.f32 %v725, %v725
        %v734 = vld [vmem:[%s289] sm:$0xff]
        %vm735 = vcmask 318464
        %v736 = vsel %vm735, %v726, 0.0
        %v737 = vrot.slane %v736, 4
        %v738 = vadd.f32 %v736, %v737
        %v739 = vrot.slane %v738, 2
        %v740 = vadd.f32 %v738, %v739
        %v741 = vrot.slane %v740, 1
        %v742 = vadd.f32 %v740, %v741
        %v743 = vsel %vm735, %v727, 0.0
        %v744 = vrot.slane %v743, 4
        %v745 = vadd.f32 %v743, %v744
        %v746 = vrot.slane %v745, 2
        %v747 = vadd.f32 %v745, %v746
        %v748 = vrot.slane %v747, 1
        %v749 = vadd.f32 %v747, %v748
        %v750 = vsel %vm735, %v728, 0.0
        %v751 = vrot.slane %v750, 4
        %v752 = vadd.f32 %v750, %v751
        %v753 = vrot.slane %v752, 2
        %v754 = vadd.f32 %v752, %v753
        %v755 = vrot.slane %v754, 1
        %v756 = vadd.f32 %v754, %v755
        %v757 = vsel %vm735, %v729, 0.0
        %v758 = vrot.slane %v757, 4
        %v759 = vadd.f32 %v757, %v758
        %v760 = vrot.slane %v759, 2
        %v761 = vadd.f32 %v759, %v760
        %v762 = vrot.slane %v761, 1
        %v763 = vadd.f32 %v761, %v762
        %v764 = vsel %vm735, %v730, 0.0
        %v765 = vrot.slane %v764, 4
        %v766 = vadd.f32 %v764, %v765
        %v767 = vrot.slane %v766, 2
        %v768 = vadd.f32 %v766, %v767
        %v769 = vrot.slane %v768, 1
        %v770 = vadd.f32 %v768, %v769
        %v771 = vsel %vm735, %v731, 0.0
        %v772 = vrot.slane %v771, 4
        %v773 = vadd.f32 %v771, %v772
        %v774 = vrot.slane %v773, 2
        %v775 = vadd.f32 %v773, %v774
        %v776 = vrot.slane %v775, 1
        %v777 = vadd.f32 %v775, %v776
        %v778 = vsel %vm735, %v732, 0.0
        %v779 = vrot.slane %v778, 4
        %v780 = vadd.f32 %v778, %v779
        %v781 = vrot.slane %v780, 2
        %v782 = vadd.f32 %v780, %v781
        %v783 = vrot.slane %v782, 1
        %v784 = vadd.f32 %v782, %v783
        %v785 = vsel %vm735, %v733, 0.0
        %v786 = vrot.slane %v785, 4
        %v787 = vadd.f32 %v785, %v786
        %v788 = vrot.slane %v787, 2
        %v789 = vadd.f32 %v787, %v788
        %v790 = vrot.slane %v789, 1
        %v791 = vadd.f32 %v789, %v790
        %vm800 = vcmask 1041409
        %v801 = vsel %vm800, %v749, %v742
        %vm802 = vcmask 1042434
        %v803 = vsel %vm802, %v756, %v801
        %vm804 = vcmask 1043459
        %v805 = vsel %vm804, %v763, %v803
        %vm806 = vcmask 1044484
        %v807 = vsel %vm806, %v770, %v805
        %vm808 = vcmask 1045509
        %v809 = vsel %vm808, %v777, %v807
        %vm810 = vcmask 1046534
        %v811 = vsel %vm810, %v784, %v809
        %vm812 = vcmask 1047559
        %v813 = vsel %vm812, %v791, %v811
        %v815 = vadd.f32 %v734, %v813
        %816 = vst.msk [vmem:[%s289] sm:$0xff] %vm735, %v815
        %s817 = sand.u32 %s129, 1
        %s818 = scalar_lea.sflag [#allocation4], %s817
        %s819 = sand.u32 %s129, 1
        %s820 = smul.addr %s819, 8
        %s821 = scalar_lea.vmem [#allocation8], %s820
        // Predicated region
        $region49: #{tpu_custom_call.1} parent=31 // pred_check
          %p822 = pneg %p139
        $region50: #{tpu_custom_call.1} parent=31 // pred_check_branch
          %824 = sbr.rel (%p822) target = $region52
        $region51: #{tpu_custom_call.1} parent=31 // pred_region
          %s826 = ssub.s32 128, 128
          %827 = vsyncadd %s818, %s826
          %s828 = smul.addr %s27, 128
          %s829 = scalar_lea.hbm %s3, %s828
          %s831 = sshll.u32 %s821, 4
          %s832 = int_to_ptr.vmem [resolvable:$true] %s831
          %834 = dma.vmem_to_hbm [thread:$0]  %s832, 128, %s829, %s818
        $region52: #{tpu_custom_call.1} parent=31 // pred_fallthru
          _
      $region32: #{tpu_custom_call.1} parent=5 // pred_fallthru
        _
      %p835 = scmp.le.s32.totalorder 2, %s18
      // Predicated region
      $region53: #{tpu_custom_call.1} parent=5 // pred_check
        %p836 = pneg %p835
      $region54: #{tpu_custom_call.1} parent=5 // pred_check_branch
        %838 = sbr.rel (%p836) target = $region56
      $region55: #{tpu_custom_call.1} parent=5 // pred_region
        %s839 = ssub.s32 %s18, 2
        // Predicated region
        $region57: #{tpu_custom_call.1} parent=55 // pred_check
          %p840 = pneg %p145
        $region58: #{tpu_custom_call.1} parent=55 // pred_check_branch
          %842 = sbr.rel (%p840) target = $region60
        $region59: #{tpu_custom_call.1} parent=55 // pred_region
          %s843 = sand.u32 %s130, 1
          %s844 = scalar_lea.sflag [#allocation4], %s843
          %s845 = sand.u32 %s130, 1
          %s846 = smul.addr %s845, 8
          %s847 = scalar_lea.vmem [#allocation8], %s846
          %848 = dma.done %s844, 128
        $region60: #{tpu_custom_call.1} parent=55 // pred_fallthru
          _
      $region56: #{tpu_custom_call.1} parent=5 // pred_fallthru
        _
    $region6: #{tpu_custom_call.1} parent=1 // loop_footer
      %s22 = sadd.s32 1, %s18
    $region7: #{tpu_custom_call.1} parent=1 // loop_footer_branch
      %17 = sbr.rel target = $region3
    $region8: #{tpu_custom_call.1} parent=1 // loop_exit
      _
    %849 = vsyncpa [#allocation3], 1
    %s850 = scalar_lea.sflag [#allocation3], 1
    %851 = vsyncpa %s850, 1
    %852 = vsyncpa [#allocation6], 1
    %s853 = scalar_lea.sflag [#allocation6], 1
    %854 = vsyncpa %s853, 1
    %855 = vsyncpa [#allocation4], 1
    %s856 = scalar_lea.sflag [#allocation4], 1
    %857 = vsyncpa %s856, 1

</llo_original>
